<compile_context>
chip_gen: v7x
topology: tpu7x:2x2x1
jax: 0.10.0
libtpu: 0.0.40
codegen_flags: <defaults>
</compile_context>

<pallas_src>
import functools
import math

import jax
import jax.numpy as jnp
from jax import lax
from jax.experimental import pallas as pl
from jax.experimental.pallas import tpu as pltpu

_LANE = 128
_MAX_TILE_ROWS = 4096                 # 4096 x 128 f32 = 2 MiB per input block
_VMEM_LIMIT = 32 * 1024 * 1024        # 3 arrays x 2 buffers x 2 MiB + headroom


def _round_up(x, m):
    return ((x + m - 1) // m) * m


def _sublane(itemsize):
    # sub-32-bit dtypes pack along sublanes: 8 rows per vreg tile for 4-byte,
    # 16 for 2-byte (bf16/fp16), 32 for 1-byte (int8/fp8)
    return max(8, 32 // max(1, itemsize))


def _pick_tile_rows(rows, sub):
    """Largest tile within the VMEM budget; aim for >=2 blocks when there is
    enough work so the 'parallel' grid axis can be sharded across both v7x
    TensorCores."""
    if rows <= 2 * sub:
        return _round_up(rows, sub)
    half = _round_up(math.ceil(rows / 2), sub)
    return min(_MAX_TILE_ROWS, half)


def _mae_e_elem_kernel(pred_ref, trg_ref, out_ref):
    p = pred_ref[...].astype(jnp.float32)
    t = trg_ref[...].astype(jnp.float32)
    # exact division to match the reference elementwise result bit-for-bit;
    # writes past the (rows, 128) output bound (ragged last block) are dropped
    out_ref[...] = jnp.abs((p - t) / t).astype(out_ref.dtype)


def _mae_e_partial_kernel(pred_ref, trg_ref, out_ref, *, rows, tile_rows,
                          needs_mask):
    p = pred_ref[...].astype(jnp.float32)
    t = trg_ref[...].astype(jnp.float32)
    # reciprocal lands on the EUP slot; kernel is HBM-bound so VALU stays free
    rel = jnp.abs((p - t) * pl.reciprocal(t, approx=False))
    if needs_mask:
        # non-divisible grid: the last block reads undefined rows — zero them
        valid = rows - pl.program_id(0) * tile_rows
        row_ids = lax.broadcasted_iota(jnp.int32, rel.shape, 0)
        rel = jnp.where(row_ids < valid, rel, 0.0)
    # fold sublane groups onto one lane-dense (8, 128) tile: pure VPU adds,
    # full-width (unmasked) writeback, trivially (8,128)-aligned BlockSpec
    out_ref[...] = rel.reshape(tile_rows // 8, 8, _LANE).sum(axis=0)


def _as_slab(pred, trg):
    """Return lane-dense (rows, 128) views of pred/trg.  Zero-copy when the
    element count is a multiple of 128 (the common case); otherwise pad the
    flat tail with ones so padded elements contribute |(1-1)/1| = 0."""
    total = pred.size
    rem = total % _LANE
    p_flat = pred.reshape(-1)
    t_flat = trg.reshape(-1)
    if rem:
        pad = _LANE - rem
        p_flat = jnp.concatenate([p_flat, jnp.ones((pad,), p_flat.dtype)])
        t_flat = jnp.concatenate([t_flat, jnp.ones((pad,), t_flat.dtype)])
    rows = p_flat.size // _LANE
    return p_flat.reshape(rows, _LANE), t_flat.reshape(rows, _LANE), total


def mae_e_loss(pred, trg, reduction="mean"):
    """JAX wrapper matching Loss2.forward semantics."""
    orig_shape = pred.shape
    out_dtype = jnp.promote_types(pred.dtype, trg.dtype)

    p2, t2, total = _as_slab(pred, trg)
    rows = p2.shape[0]
    itemsize = min(jnp.dtype(pred.dtype).itemsize, jnp.dtype(trg.dtype).itemsize)
    sub = _sublane(itemsize)
    tile_rows = _pick_tile_rows(rows, sub)
    num_blocks = math.ceil(rows / tile_rows)

    in_spec = pl.BlockSpec((tile_rows, _LANE), lambda i: (i, 0))
    cparams = pltpu.CompilerParams(
        dimension_semantics=("parallel",),
        vmem_limit_bytes=_VMEM_LIMIT,
    )

    if reduction == "none":
        out = pl.pallas_call(
            _mae_e_elem_kernel,
            out_shape=jax.ShapeDtypeStruct((rows, _LANE), out_dtype),
            grid_spec=pltpu.PrefetchScalarGridSpec(
                num_scalar_prefetch=0,
                grid=(num_blocks,),
                in_specs=[in_spec, in_spec],
                out_specs=pl.BlockSpec((tile_rows, _LANE), lambda i: (i, 0)),
            ),
            compiler_params=cparams,
        )(p2, t2)
        if total == rows * _LANE:
            return out.reshape(orig_shape)      # free reshape, no slice copy
        return out.reshape(-1)[:total].reshape(orig_shape)

    # mean / sum: per-block, per-lane partial sums ((8,128) tile per block),
    # independent across grid steps ("parallel" => megacore-shardable);
    # the tiny cross-lane / cross-block reduce happens outside the kernel.
    kernel = functools.partial(
        _mae_e_partial_kernel,
        rows=rows,
        tile_rows=tile_rows,
        needs_mask=(rows % tile_rows) != 0,
    )
    partials = pl.pallas_call(
        kernel,
        out_shape=jax.ShapeDtypeStruct((num_blocks * 8, _LANE), jnp.float32),
        grid_spec=pltpu.PrefetchScalarGridSpec(
            num_scalar_prefetch=0,
            grid=(num_blocks,),
            in_specs=[in_spec, in_spec],
            out_specs=pl.BlockSpec((8, _LANE), lambda i: (i, 0)),
        ),
        compiler_params=cparams,
    )(p2, t2)

    s = jnp.sum(partials)
    if reduction == "sum":
        return s.astype(out_dtype)
    return (s / jnp.float32(total)).astype(out_dtype)


if __name__ == "__main__":
    key = jax.random.PRNGKey(0)
    kp, kt, kp2, kt2 = jax.random.split(key, 4)

    # Small NCHW-like shapes: batch=2, channels=4, spatial=16x16
    shape = (2, 4, 16, 16)
    pred = jax.random.normal(kp, shape, dtype=jnp.float32)
    # keep targets away from zero so the relative error is well-defined
    trg = jax.random.uniform(kt, shape, dtype=jnp.float32,
                             minval=0.5, maxval=1.5)

    loss_mean = jax.block_until_ready(mae_e_loss(pred, trg, reduction="mean"))
    loss_sum = jax.block_until_ready(mae_e_loss(pred, trg, reduction="sum"))
    loss_none = jax.block_until_ready(mae_e_loss(pred, trg, reduction="none"))

    ref = jnp.abs((pred - trg) / trg)
    assert jnp.allclose(loss_mean, ref.mean(), rtol=1e-5, atol=1e-5)
    assert jnp.allclose(loss_sum, ref.sum(), rtol=1e-5, atol=1e-3)
    assert loss_none.shape == shape
    assert jnp.allclose(loss_none, ref, rtol=1e-6, atol=1e-6)

    # Ragged shape (not a multiple of 128) exercises the padded-tail fallback
    # and the in-kernel row mask.
    rshape = (3, 5, 7)
    rpred = jax.random.normal(kp2, rshape, dtype=jnp.float32)
    rtrg = jax.random.uniform(kt2, rshape, dtype=jnp.float32,
                              minval=0.5, maxval=1.5)
    rref = jnp.abs((rpred - rtrg) / rtrg)
    r_mean = jax.block_until_ready(mae_e_loss(rpred, rtrg, reduction="mean"))
    r_sum = jax.block_until_ready(mae_e_loss(rpred, rtrg, reduction="sum"))
    r_none = jax.block_until_ready(mae_e_loss(rpred, rtrg, reduction="none"))
    assert jnp.allclose(r_mean, rref.mean(), rtol=1e-5, atol=1e-5)
    assert jnp.allclose(r_sum, rref.sum(), rtol=1e-5, atol=1e-3)
    assert r_none.shape == rshape
    assert jnp.allclose(r_none, rref, rtol=1e-6, atol=1e-6)

    print("KERNEL_OK")
</pallas_src>

<mosaic_0001>
module attributes {stable_mosaic.version = 11 : i64} {
  func.func @_mae_e_partial_kernel(%arg0: i32, %arg1: memref<16x128xf32, #tpu.memory_space<vmem>>, %arg2: memref<16x128xf32, #tpu.memory_space<vmem>>, %arg3: memref<8x128xf32, #tpu.memory_space<vmem>>) attributes {dimension_semantics = [#tpu.dimension_semantics<parallel>], iteration_bounds = array<i64: 1>, scalar_prefetch = 0 : i64, scratch_operands = 0 : i64, tpu.core_type = #tpu.core_type<tc>, window_params = [{transform_indices = @transform_0, window_bounds = array<i64: 16, 128>}, {transform_indices = @transform_1, window_bounds = array<i64: 16, 128>}, {transform_indices = @transform_2, window_bounds = array<i64: 8, 128>}]} {
    %c0 = arith.constant 0 : index
    %c0_0 = arith.constant 0 : index
    %0 = vector.load %arg1[%c0, %c0_0] : memref<16x128xf32, #tpu.memory_space<vmem>>, vector<16x128xf32>
    %c0_1 = arith.constant 0 : index
    %c0_2 = arith.constant 0 : index
    %1 = vector.load %arg2[%c0_1, %c0_2] : memref<16x128xf32, #tpu.memory_space<vmem>>, vector<16x128xf32>
    %2 = arith.subf %0, %1 : vector<16x128xf32>
    %3 = tpu.reciprocal %1 : vector<16x128xf32> -> vector<16x128xf32>
    %4 = arith.mulf %2, %3 : vector<16x128xf32>
    %5 = math.absf %4 : vector<16x128xf32>
    %6 = vector.shape_cast %5 : vector<16x128xf32> to vector<2x8x128xf32>
    %cst = arith.constant dense<0.000000e+00> : vector<8x128xf32>
    %7 = vector.multi_reduction <add>, %6, %cst [0] : vector<2x8x128xf32> to vector<8x128xf32>
    %c0_3 = arith.constant 0 : index
    %c0_4 = arith.constant 0 : index
    %8 = vector.load %arg3[%c0_3, %c0_4] : memref<8x128xf32, #tpu.memory_space<vmem>>, vector<8x128xf32>
    tpu.vector_store %arg3[%c0_3, %c0_4], %7 {strides = array<i32>} : memref<8x128xf32, #tpu.memory_space<vmem>>, vector<8x128xf32>,
    return
  }
  func.func @transform_0(%arg0: i32) -> (i32, i32) {
    %c0_i32 = arith.constant 0 : i32
    %c0_i32_0 = arith.constant 0 : i32
    return %arg0, %c0_i32 : i32, i32
  }
  func.func @transform_1(%arg0: i32) -> (i32, i32) {
    %c0_i32 = arith.constant 0 : i32
    %c0_i32_0 = arith.constant 0 : i32
    return %arg0, %c0_i32 : i32, i32
  }
  func.func @transform_2(%arg0: i32) -> (i32, i32) {
    %c0_i32 = arith.constant 0 : i32
    %c0_i32_0 = arith.constant 0 : i32
    return %arg0, %c0_i32 : i32, i32
  }
}

</mosaic_0001>

<llo_original>
// kernel: tpu_custom_call.1
$region0: #{tpu_custom_call.1}
  #allocation0 [shape = 'u32[]', space=smem, size = 0x4, offset = 0x4, fixed_abs, tag = 'smem constant byte address 0x4 - core index']
  #allocation1 [shape = 'u32[144,128]{1,0:T(1,128)}', space=vmem, size = 0x12000, scoped, tag = 'internal scratch']
  %s0 = inlined_call_operand.hbm [shape: f32[16,128], index: 0, kind: input, shape index: {}]
  %s1 = inlined_call_operand.hbm [shape: f32[16,128], index: 1, kind: input, shape index: {}]
  %s2 = inlined_call_operand.hbm [shape: f32[8,128], index: 2, kind: output, shape index: {}]
  %s3 = sld [smem:[#allocation0]]
  $region26: #{tpu_custom_call.1} parent=0
    _
  %s5 = ssub.s32 1, %s3
  %s6 = scalar_select 0, %s5, %s3
  $region1: #{tpu_custom_call.1} parent=0
    #allocation2 [shape = 'u8[8192]{0}', space=vmem, size = 0x2000, scoped, tag = 'input window, operand 0, single buffered']
    #allocation3 [shape = 's32[1]{0}', space=sflag, size = 0x4, scoped, tag = 'scoped memory for tpu_custom_call.1']
    #allocation4 [shape = 's32[1]{0}', space=sflag, size = 0x4, scoped, tag = 'scoped memory for tpu_custom_call.1']
    #allocation5 [shape = 'u8[8192]{0}', space=vmem, size = 0x2000, scoped, tag = 'input window, operand 1, single buffered']
    #allocation6 [shape = 's32[1]{0}', space=sflag, size = 0x4, scoped, tag = 'scoped memory for tpu_custom_call.1']
    #allocation7 [shape = 'u8[4096]{0}', space=vmem, size = 0x1000, scoped, tag = 'output window, operand 0, single buffered']
    %7 = vsyncpa [#allocation3], 0
    %8 = vsyncpa [#allocation6], 0
    %9 = vsyncpa [#allocation4], 0
    // Predicated region
    $region2: #{tpu_custom_call.1} parent=1 // pred_check
      _
    $region3: #{tpu_custom_call.1} parent=1 // pred_check_branch
      %11 = sbr.rel (0) target = $region5
    $region4: #{tpu_custom_call.1} parent=1 // pred_region
      %s13 = ssub.s32 256, 256
      %14 = vsyncadd [#allocation3], %s13
      %s15 = sshll.u32 [#allocation2], 4
      %s16 = int_to_ptr.vmem [resolvable:$true] %s15
      %21 = dma.hbm_to_vmem [thread:$0]  %s0, 256, %s16, [#allocation3], 128, 128, 8
    $region5: #{tpu_custom_call.1} parent=1 // pred_fallthru
      _
    // Predicated region
    $region6: #{tpu_custom_call.1} parent=1 // pred_check
      _
    $region7: #{tpu_custom_call.1} parent=1 // pred_check_branch
      %23 = sbr.rel (0) target = $region9
    $region8: #{tpu_custom_call.1} parent=1 // pred_region
      %s25 = ssub.s32 256, 256
      %26 = vsyncadd [#allocation6], %s25
      %s27 = sshll.u32 [#allocation5], 4
      %s28 = int_to_ptr.vmem [resolvable:$true] %s27
      %33 = dma.hbm_to_vmem [thread:$0]  %s1, 256, %s28, [#allocation6], 128, 128, 8
    $region9: #{tpu_custom_call.1} parent=1 // pred_fallthru
      _
    // Predicated region
    $region10: #{tpu_custom_call.1} parent=1 // pred_check
      _
    $region11: #{tpu_custom_call.1} parent=1 // pred_check_branch
      %35 = sbr.rel (0) target = $region13
    $region12: #{tpu_custom_call.1} parent=1 // pred_region
      %36 = dma.done [#allocation3], 256
    $region13: #{tpu_custom_call.1} parent=1 // pred_fallthru
      _
    // Predicated region
    $region14: #{tpu_custom_call.1} parent=1 // pred_check
      _
    $region15: #{tpu_custom_call.1} parent=1 // pred_check_branch
      %38 = sbr.rel (0) target = $region17
    $region16: #{tpu_custom_call.1} parent=1 // pred_region
      %39 = dma.done [#allocation6], 256
    $region17: #{tpu_custom_call.1} parent=1 // pred_fallthru
      _
    %v40 = vld [vmem:[#allocation2] sm:$0xff]
    %v41 = vld [vmem:[#allocation2 + $0x8] sm:$0xff]
    %v42 = vld [vmem:[#allocation5] sm:$0xff]
    %v43 = vld [vmem:[#allocation5 + $0x8] sm:$0xff]
    %v44 = vsub.f32 %v40, %v42
    %v45 = vsub.f32 %v41, %v43
    %v46 = vrcp.pop %v42
    %v47 = vrcp.pop %v43
    %v48 = vmul.f32 %v44, %v46
    %v49 = vmul.f32 %v45, %v47
    %v50 = vand.u32 2147483647, %v48
    %v51 = vand.u32 2147483647, %v49
    %v52 = vadd.f32 %v50, %v51
    %53 = vst [vmem:[#allocation7] sm:$0xff] %v52
    // Predicated region
    $region18: #{tpu_custom_call.1} parent=1 // pred_check
      _
    $region19: #{tpu_custom_call.1} parent=1 // pred_check_branch
      %55 = sbr.rel (0) target = $region21
    $region20: #{tpu_custom_call.1} parent=1 // pred_region
      %s57 = ssub.s32 128, 128
      %58 = vsyncadd [#allocation4], %s57
      %s60 = sshll.u32 [#allocation7], 4
      %s61 = int_to_ptr.vmem [resolvable:$true] %s60
      %63 = dma.vmem_to_hbm [thread:$0]  %s61, 128, %s2, [#allocation4]
    $region21: #{tpu_custom_call.1} parent=1 // pred_fallthru
      _
    // Predicated region
    $region22: #{tpu_custom_call.1} parent=1 // pred_check
      _
    $region23: #{tpu_custom_call.1} parent=1 // pred_check_branch
      %65 = sbr.rel (0) target = $region25
    $region24: #{tpu_custom_call.1} parent=1 // pred_region
      %66 = dma.done [#allocation4], 128
    $region25: #{tpu_custom_call.1} parent=1 // pred_fallthru
      _
    %67 = vsyncpa [#allocation3], 1
    %68 = vsyncpa [#allocation6], 1
    %69 = vsyncpa [#allocation4], 1

</llo_original>
